<compile_context>
chip_gen: v5e
topology: v5e:2x2
jax: 0.10.0
libtpu: 0.0.40
codegen_flags: <defaults>
</compile_context>

<pallas_src>
import jax
import jax.numpy as jnp
from jax import lax
from jax.experimental import pallas as pl
from jax.experimental.pallas import tpu as pltpu


# ----------------------------------------------------------------------------
# Fused Pallas kernel
# ----------------------------------------------------------------------------
def _propagate_kernel(xc_ref, xn_ref, rp_ref, idxr_ref,
                      wpos_ref, g_ref, bt_ref,
                      wmp_ref, wxn_ref, bm_ref, bv_ref, o_ref):
    M, C = xn_ref.shape
    N = xc_ref.shape[0]
    Cs = wmp_ref.shape[1]
    S = C // Cs  # share_planes

    # ---- pos_encoder: Linear(3->C, bias=False) as 3 VPU broadcast-FMAs (no MXU, no padding)
    rp = rp_ref[...]                                                    # [M, 3] f32
    h = (rp[:, 0:1] * wpos_ref[0:1, :]
         + rp[:, 1:2] * wpos_ref[1:2, :]
         + rp[:, 2:3] * wpos_ref[2:3, :])                               # [M, C] f32

    # training-mode BatchNorm1d (biased var, two-pass form) -> ReLU
    mu = jnp.mean(h, axis=0, keepdims=True)
    var = jnp.mean((h - mu) ** 2, axis=0, keepdims=True)
    scale = g_ref[...] * lax.rsqrt(var + 1e-5)
    shift = bt_ref[...] - mu * scale
    pos_emb = jnp.maximum(h * scale + shift, 0.0)                       # [M, C] f32

    # ---- mixer + value_proj: xn feeds ONE fused bf16 MXU matmul (wxn = [wmx | wval])
    xn = xn_ref[...]                                                    # [M, C] bf16
    mv = jnp.dot(xn, wxn_ref[...], preferred_element_type=jnp.float32)  # [M, 2Cs] f32
    mix = jnp.maximum(
        jnp.dot(pos_emb.astype(jnp.bfloat16), wmp_ref[...],
                preferred_element_type=jnp.float32)
        + mv[:, :Cs] + bm_ref[...], 0.0)                                # [M, Cs]
    val = jnp.maximum(mv[:, Cs:] + bv_ref[...], 0.0)                    # [M, Cs]

    # ---- scatter_softmax + scatter_sum, normalization folded into the segment reduction
    # Per-column global max is constant per column and softmax is shift-invariant per
    # segment, so exp(mix - col_max) normalizes identically to per-segment stabilization.
    col_max = jnp.max(mix, axis=0, keepdims=True)                       # [1, Cs]
    e = jnp.exp(mix - col_max)                                          # [M, Cs] f32

    # oh_t[n, m] = 1 iff neighbor_idx[m] == n   (built in-kernel, exact in bf16)
    oh_t = jnp.where(
        lax.broadcasted_iota(jnp.int32, (N, M), 0) == idxr_ref[...],
        1.0, 0.0).astype(jnp.bfloat16)                                  # [N, M]

    # One MXU pass produces both the softmax denominator and the weighted-value sum.
    seg = jnp.dot(oh_t,
                  jnp.concatenate([e, val * e], axis=1).astype(jnp.bfloat16),
                  preferred_element_type=jnp.float32)                   # [N, 2Cs]
    seg_sum, num = seg[:, :Cs], seg[:, Cs:]
    inv = jnp.where(seg_sum > 0.0, pl.reciprocal(seg_sum, approx=True), 0.0)
    agg = num * inv                                                     # [N, Cs]

    # repeat along features (share_planes) + residual
    o_ref[...] = xc_ref[...] + jnp.tile(agg, (1, S))


# ----------------------------------------------------------------------------
# Wrapper
# ----------------------------------------------------------------------------
def propagate_layer(x_center, x_neighbors, neighbor_idx, rel_pos, params, share_planes):
    w_pos, gamma, beta, w_mix, b_mix, w_val, b_val = params
    N, C = x_center.shape
    K = neighbor_idx.shape[1]
    M = N * K
    Cs = C // share_planes

    xn = x_neighbors.reshape(M, C).astype(jnp.bfloat16)      # DMA'd at half width
    rp = rel_pos.reshape(M, 3).astype(jnp.float32)
    idx_row = neighbor_idx.reshape(1, M).astype(jnp.int32)
    wmp = w_mix[:C].astype(jnp.bfloat16)                      # mixer pos-half
    wxn = jnp.concatenate([w_mix[C:], w_val], axis=1).astype(jnp.bfloat16)  # [wmx | wval]

    def fs(r, c):
        return pl.BlockSpec((r, c), lambda i: (0, 0))

    return pl.pallas_call(
        _propagate_kernel,
        out_shape=jax.ShapeDtypeStruct((N, C), jnp.float32),
        grid=(1,),
        in_specs=[
            fs(N, C),       # x_center (f32)
            fs(M, C),       # x_neighbors flattened (bf16)
            fs(M, 3),       # rel_pos
            fs(1, M),       # neighbor_idx row
            fs(3, C),       # W_pos
            fs(1, C),       # gamma
            fs(1, C),       # beta
            fs(C, Cs),      # W_mix pos half (bf16)
            fs(C, 2 * Cs),  # [W_mix feat half | W_val] (bf16)
            fs(1, Cs),      # b_mix
            fs(1, Cs),      # b_val
        ],
        out_specs=fs(N, C),
        compiler_params=pltpu.CompilerParams(dimension_semantics=("arbitrary",)),
    )(
        x_center.astype(jnp.float32), xn, rp, idx_row,
        w_pos.astype(jnp.float32), gamma.reshape(1, C), beta.reshape(1, C),
        wmp, wxn, b_mix.reshape(1, Cs), b_val.reshape(1, Cs),
    )


# ----------------------------------------------------------------------------
# Pure-JAX reference (for correctness check)
# ----------------------------------------------------------------------------
def propagate_ref(x_center, x_neighbors, neighbor_idx, rel_pos, params, share_planes):
    w_pos, gamma, beta, w_mix, b_mix, w_val, b_val = params
    N, C = x_center.shape
    idx = neighbor_idx.reshape(-1)
    xn = x_neighbors.reshape(-1, C)
    rp = rel_pos.reshape(-1, 3)

    h = rp @ w_pos
    mu = h.mean(0)
    var = ((h - mu) ** 2).mean(0)
    pe = jnp.maximum((h - mu) / jnp.sqrt(var + 1e-5) * gamma + beta, 0.0)

    mix = jnp.maximum(jnp.concatenate([pe, xn], axis=1) @ w_mix + b_mix, 0.0)
    seg_max = jax.ops.segment_max(mix, idx, num_segments=N)
    seg_max = jnp.where(jnp.isfinite(seg_max), seg_max, 0.0)
    e = jnp.exp(mix - seg_max[idx])
    denom = jax.ops.segment_sum(e, idx, num_segments=N)[idx]
    attn = e / denom

    val = jnp.maximum(xn @ w_val + b_val, 0.0)
    agg = jax.ops.segment_sum(val * attn, idx, num_segments=N)
    return x_center + jnp.tile(agg, (1, share_planes))


if __name__ == "__main__":
    in_planes = 128      # lane-dense output (multiple of 128)
    share_planes = 4
    nsample = 8
    N = 16
    Cs = in_planes // share_planes

    key = jax.random.PRNGKey(0)
    ks = jax.random.split(key, 9)

    x_center = jax.random.normal(ks[0], (N, in_planes), jnp.float32)
    x_neighbors = jax.random.normal(ks[1], (N, nsample, in_planes), jnp.float32)
    rel_pos = jax.random.normal(ks[2], (N, nsample, 3), jnp.float32)
    neighbor_idx = jax.random.randint(ks[3], (N, nsample), 0, N, dtype=jnp.int32)

    w_pos = jax.random.normal(ks[4], (3, in_planes), jnp.float32) / jnp.sqrt(3.0)
    gamma = jnp.ones((in_planes,), jnp.float32)
    beta = jnp.zeros((in_planes,), jnp.float32)
    w_mix = jax.random.normal(ks[5], (2 * in_planes, Cs), jnp.float32) / jnp.sqrt(2.0 * in_planes)
    b_mix = 0.01 * jax.random.normal(ks[6], (Cs,), jnp.float32)
    w_val = jax.random.normal(ks[7], (in_planes, Cs), jnp.float32) / jnp.sqrt(float(in_planes))
    b_val = 0.01 * jax.random.normal(ks[8], (Cs,), jnp.float32)
    params = (w_pos, gamma, beta, w_mix, b_mix, w_val, b_val)

    out = propagate_layer(x_center, x_neighbors, neighbor_idx, rel_pos, params, share_planes)
    jax.block_until_ready(out)
    assert out.shape == (N, in_planes)

    ref = propagate_ref(x_center, x_neighbors, neighbor_idx, rel_pos, params, share_planes)
    max_err = float(jnp.max(jnp.abs(out - ref)))
    # bf16 MXU operands -> looser tolerance than a pure-f32 kernel
    assert jnp.allclose(out, ref, atol=3e-2, rtol=3e-2), max_err

    print("KERNEL_OK")
</pallas_src>

<mosaic_0001>
module attributes {stable_mosaic.version = 11 : i64} {
  func.func @_propagate_kernel(%arg0: i32, %arg1: memref<16x128xf32, #tpu.memory_space<vmem>>, %arg2: memref<128x128xbf16, #tpu.memory_space<vmem>>, %arg3: memref<128x3xf32, #tpu.memory_space<vmem>>, %arg4: memref<1x128xi32, #tpu.memory_space<vmem>>, %arg5: memref<3x128xf32, #tpu.memory_space<vmem>>, %arg6: memref<1x128xf32, #tpu.memory_space<vmem>>, %arg7: memref<1x128xf32, #tpu.memory_space<vmem>>, %arg8: memref<128x32xbf16, #tpu.memory_space<vmem>>, %arg9: memref<128x64xbf16, #tpu.memory_space<vmem>>, %arg10: memref<1x32xf32, #tpu.memory_space<vmem>>, %arg11: memref<1x32xf32, #tpu.memory_space<vmem>>, %arg12: memref<16x128xf32, #tpu.memory_space<vmem>>) attributes {dimension_semantics = [#tpu.dimension_semantics<arbitrary>], iteration_bounds = array<i64: 1>, scalar_prefetch = 0 : i64, scratch_operands = 0 : i64, tpu.core_type = #tpu.core_type<tc>, window_params = [{pipeline_mode = #tpu.pipeline_mode<synchronous>, transform_indices = @transform_0, window_bounds = array<i64: 16, 128>}, {pipeline_mode = #tpu.pipeline_mode<synchronous>, transform_indices = @transform_1, window_bounds = array<i64: 128, 128>}, {pipeline_mode = #tpu.pipeline_mode<synchronous>, transform_indices = @transform_2, window_bounds = array<i64: 128, 3>}, {pipeline_mode = #tpu.pipeline_mode<synchronous>, transform_indices = @transform_3, window_bounds = array<i64: 1, 128>}, {pipeline_mode = #tpu.pipeline_mode<synchronous>, transform_indices = @transform_4, window_bounds = array<i64: 3, 128>}, {pipeline_mode = #tpu.pipeline_mode<synchronous>, transform_indices = @transform_5, window_bounds = array<i64: 1, 128>}, {pipeline_mode = #tpu.pipeline_mode<synchronous>, transform_indices = @transform_6, window_bounds = array<i64: 1, 128>}, {pipeline_mode = #tpu.pipeline_mode<synchronous>, transform_indices = @transform_7, window_bounds = array<i64: 128, 32>}, {pipeline_mode = #tpu.pipeline_mode<synchronous>, transform_indices = @transform_8, window_bounds = array<i64: 128, 64>}, {pipeline_mode = #tpu.pipeline_mode<synchronous>, transform_indices = @transform_9, window_bounds = array<i64: 1, 32>}, {pipeline_mode = #tpu.pipeline_mode<synchronous>, transform_indices = @transform_10, window_bounds = array<i64: 1, 32>}, {pipeline_mode = #tpu.pipeline_mode<synchronous>, transform_indices = @transform_11, window_bounds = array<i64: 16, 128>}]} {
    %c0 = arith.constant 0 : index
    %c0_0 = arith.constant 0 : index
    %0 = vector.load %arg3[%c0, %c0_0] : memref<128x3xf32, #tpu.memory_space<vmem>>, vector<128x3xf32>
    %1 = vector.extract_strided_slice %0 {offsets = [0, 0], sizes = [128, 1], strides = [1, 1]} : vector<128x3xf32> to vector<128x1xf32>
    %c0_1 = arith.constant 0 : index
    %c0_2 = arith.constant 0 : index
    %2 = vector.load %arg5[%c0_1, %c0_2] : memref<3x128xf32, #tpu.memory_space<vmem>>, vector<1x128xf32>
    %3 = vector.broadcast %1 : vector<128x1xf32> to vector<128x128xf32>
    %4 = vector.broadcast %2 : vector<1x128xf32> to vector<128x128xf32>
    %5 = arith.mulf %3, %4 : vector<128x128xf32>
    %6 = vector.extract_strided_slice %0 {offsets = [0, 1], sizes = [128, 1], strides = [1, 1]} : vector<128x3xf32> to vector<128x1xf32>
    %c1 = arith.constant 1 : index
    %c0_3 = arith.constant 0 : index
    %7 = vector.load %arg5[%c1, %c0_3] : memref<3x128xf32, #tpu.memory_space<vmem>>, vector<1x128xf32>
    %8 = vector.broadcast %6 : vector<128x1xf32> to vector<128x128xf32>
    %9 = vector.broadcast %7 : vector<1x128xf32> to vector<128x128xf32>
    %10 = arith.mulf %8, %9 : vector<128x128xf32>
    %11 = arith.addf %5, %10 : vector<128x128xf32>
    %12 = vector.extract_strided_slice %0 {offsets = [0, 2], sizes = [128, 1], strides = [1, 1]} : vector<128x3xf32> to vector<128x1xf32>
    %c2 = arith.constant 2 : index
    %c0_4 = arith.constant 0 : index
    %13 = vector.load %arg5[%c2, %c0_4] : memref<3x128xf32, #tpu.memory_space<vmem>>, vector<1x128xf32>
    %14 = vector.broadcast %12 : vector<128x1xf32> to vector<128x128xf32>
    %15 = vector.broadcast %13 : vector<1x128xf32> to vector<128x128xf32>
    %16 = arith.mulf %14, %15 : vector<128x128xf32>
    %17 = arith.addf %11, %16 : vector<128x128xf32>
    %cst = arith.constant dense<0.000000e+00> : vector<128xf32>
    %18 = vector.multi_reduction <add>, %17, %cst [0] : vector<128x128xf32> to vector<128xf32>
    %19 = vector.shape_cast %18 : vector<128xf32> to vector<1x128xf32>
    %cst_5 = arith.constant 1.280000e+02 : f32
    %20 = vector.broadcast %cst_5 : f32 to vector<1x128xf32>
    %21 = arith.divf %19, %20 : vector<1x128xf32>
    %22 = vector.broadcast %21 : vector<1x128xf32> to vector<128x128xf32>
    %23 = arith.subf %17, %22 : vector<128x128xf32>
    %24 = arith.mulf %23, %23 : vector<128x128xf32>
    %cst_6 = arith.constant dense<0.000000e+00> : vector<128xf32>
    %25 = vector.multi_reduction <add>, %24, %cst_6 [0] : vector<128x128xf32> to vector<128xf32>
    %26 = vector.shape_cast %25 : vector<128xf32> to vector<1x128xf32>
    %cst_7 = arith.constant 1.280000e+02 : f32
    %27 = vector.broadcast %cst_7 : f32 to vector<1x128xf32>
    %28 = arith.divf %26, %27 : vector<1x128xf32>
    %c0_8 = arith.constant 0 : index
    %c0_9 = arith.constant 0 : index
    %29 = vector.load %arg6[%c0_8, %c0_9] : memref<1x128xf32, #tpu.memory_space<vmem>>, vector<1x128xf32>
    %cst_10 = arith.constant 9.99999974E-6 : f32
    %30 = vector.broadcast %cst_10 : f32 to vector<1x128xf32>
    %31 = arith.addf %28, %30 : vector<1x128xf32>
    %32 = math.rsqrt %31 : vector<1x128xf32>
    %33 = arith.mulf %29, %32 : vector<1x128xf32>
    %c0_11 = arith.constant 0 : index
    %c0_12 = arith.constant 0 : index
    %34 = vector.load %arg7[%c0_11, %c0_12] : memref<1x128xf32, #tpu.memory_space<vmem>>, vector<1x128xf32>
    %35 = arith.mulf %21, %33 : vector<1x128xf32>
    %36 = arith.subf %34, %35 : vector<1x128xf32>
    %37 = vector.broadcast %33 : vector<1x128xf32> to vector<128x128xf32>
    %38 = arith.mulf %17, %37 : vector<128x128xf32>
    %39 = vector.broadcast %36 : vector<1x128xf32> to vector<128x128xf32>
    %40 = arith.addf %38, %39 : vector<128x128xf32>
    %cst_13 = arith.constant 0.000000e+00 : f32
    %41 = vector.broadcast %cst_13 : f32 to vector<128x128xf32>
    %42 = arith.maximumf %40, %41 : vector<128x128xf32>
    %c0_14 = arith.constant 0 : index
    %c0_15 = arith.constant 0 : index
    %43 = vector.load %arg2[%c0_14, %c0_15] : memref<128x128xbf16, #tpu.memory_space<vmem>>, vector<128x128xbf16>
    %c0_16 = arith.constant 0 : index
    %c0_17 = arith.constant 0 : index
    %44 = vector.load %arg9[%c0_16, %c0_17] : memref<128x64xbf16, #tpu.memory_space<vmem>>, vector<128x64xbf16>
    %cst_18 = arith.constant dense<0.000000e+00> : vector<128x64xf32>
    %45 = tpu.matmul %43, %44, %cst_18 {dimension_numbers = #tpu.dot_dimension_numbers<[1], [0], [0], [1], [0, 0, 1, 1], [], []>} : vector<128x128xbf16>, vector<128x64xbf16>, vector<128x64xf32> -> vector<128x64xf32>
    %46 = arith.truncf %42 : vector<128x128xf32> to vector<128x128xbf16>
    %c0_19 = arith.constant 0 : index
    %c0_20 = arith.constant 0 : index
    %47 = vector.load %arg8[%c0_19, %c0_20] : memref<128x32xbf16, #tpu.memory_space<vmem>>, vector<128x32xbf16>
    %cst_21 = arith.constant dense<0.000000e+00> : vector<128x32xf32>
    %48 = tpu.matmul %46, %47, %cst_21 {dimension_numbers = #tpu.dot_dimension_numbers<[1], [0], [0], [1], [0, 0, 1, 1], [], []>} : vector<128x128xbf16>, vector<128x32xbf16>, vector<128x32xf32> -> vector<128x32xf32>
    %49 = vector.extract_strided_slice %45 {offsets = [0, 0], sizes = [128, 32], strides = [1, 1]} : vector<128x64xf32> to vector<128x32xf32>
    %50 = arith.addf %48, %49 : vector<128x32xf32>
    %c0_22 = arith.constant 0 : index
    %c0_23 = arith.constant 0 : index
    %51 = vector.load %arg10[%c0_22, %c0_23] : memref<1x32xf32, #tpu.memory_space<vmem>>, vector<1x32xf32>
    %52 = vector.broadcast %51 : vector<1x32xf32> to vector<128x32xf32>
    %53 = arith.addf %50, %52 : vector<128x32xf32>
    %cst_24 = arith.constant 0.000000e+00 : f32
    %54 = vector.broadcast %cst_24 : f32 to vector<128x32xf32>
    %55 = arith.maximumf %53, %54 : vector<128x32xf32>
    %56 = vector.extract_strided_slice %45 {offsets = [0, 32], sizes = [128, 32], strides = [1, 1]} : vector<128x64xf32> to vector<128x32xf32>
    %c0_25 = arith.constant 0 : index
    %c0_26 = arith.constant 0 : index
    %57 = vector.load %arg11[%c0_25, %c0_26] : memref<1x32xf32, #tpu.memory_space<vmem>>, vector<1x32xf32>
    %58 = vector.broadcast %57 : vector<1x32xf32> to vector<128x32xf32>
    %59 = arith.addf %56, %58 : vector<128x32xf32>
    %cst_27 = arith.constant 0.000000e+00 : f32
    %60 = vector.broadcast %cst_27 : f32 to vector<128x32xf32>
    %61 = arith.maximumf %59, %60 : vector<128x32xf32>
    %cst_28 = arith.constant dense<0xFF800000> : vector<32xf32>
    %62 = vector.multi_reduction <maximumf>, %55, %cst_28 [0] : vector<128x32xf32> to vector<32xf32>
    %63 = vector.shape_cast %62 : vector<32xf32> to vector<1x32xf32>
    %64 = vector.broadcast %63 : vector<1x32xf32> to vector<128x32xf32>
    %65 = arith.subf %55, %64 : vector<128x32xf32>
    %66 = math.exp %65 : vector<128x32xf32>
    %67 = tpu.iota {dimensions = array<i32: 0>} : vector<16x128xi32>
    %c0_29 = arith.constant 0 : index
    %c0_30 = arith.constant 0 : index
    %68 = vector.load %arg4[%c0_29, %c0_30] : memref<1x128xi32, #tpu.memory_space<vmem>>, vector<1x128xi32>
    %69 = vector.broadcast %68 : vector<1x128xi32> to vector<16x128xi32>
    %70 = arith.cmpi eq, %67, %69 : vector<16x128xi32>
    %cst_31 = arith.constant 1.000000e+00 : f32
    %cst_32 = arith.constant 0.000000e+00 : f32
    %71 = vector.broadcast %cst_31 : f32 to vector<16x128xf32>
    %72 = vector.broadcast %cst_32 : f32 to vector<16x128xf32>
    %73 = arith.select %70, %71, %72 : vector<16x128xi1>, vector<16x128xf32>
    %74 = arith.truncf %73 : vector<16x128xf32> to vector<16x128xbf16>
    %75 = arith.mulf %61, %66 : vector<128x32xf32>
    %76 = tpu.concatenate %66, %75 in 1 : vector<128x32xf32>, vector<128x32xf32> -> vector<128x64xf32>
    %77 = arith.truncf %76 : vector<128x64xf32> to vector<128x64xbf16>
    %cst_33 = arith.constant dense<0.000000e+00> : vector<16x64xf32>
    %78 = tpu.matmul %74, %77, %cst_33 {dimension_numbers = #tpu.dot_dimension_numbers<[1], [0], [0], [1], [0, 0, 1, 1], [], []>} : vector<16x128xbf16>, vector<128x64xbf16>, vector<16x64xf32> -> vector<16x64xf32>
    %79 = vector.extract_strided_slice %78 {offsets = [0, 0], sizes = [16, 32], strides = [1, 1]} : vector<16x64xf32> to vector<16x32xf32>
    %80 = vector.extract_strided_slice %78 {offsets = [0, 32], sizes = [16, 32], strides = [1, 1]} : vector<16x64xf32> to vector<16x32xf32>
    %cst_34 = arith.constant 0.000000e+00 : f32
    %81 = vector.broadcast %cst_34 : f32 to vector<16x32xf32>
    %82 = arith.cmpf ogt, %79, %81 : vector<16x32xf32>
    %83 = tpu.reciprocal %79 {approx = true} : vector<16x32xf32> -> vector<16x32xf32>
    %cst_35 = arith.constant 0.000000e+00 : f32
    %84 = vector.broadcast %cst_35 : f32 to vector<16x32xf32>
    %85 = arith.select %82, %83, %84 : vector<16x32xi1>, vector<16x32xf32>
    %86 = arith.mulf %80, %85 : vector<16x32xf32>
    %c0_36 = arith.constant 0 : index
    %c0_37 = arith.constant 0 : index
    %87 = vector.load %arg1[%c0_36, %c0_37] : memref<16x128xf32, #tpu.memory_space<vmem>>, vector<16x128xf32>
    %88 = tpu.concatenate %86, %86, %86, %86 in 1 : vector<16x32xf32>, vector<16x32xf32>, vector<16x32xf32>, vector<16x32xf32> -> vector<16x128xf32>
    %89 = arith.addf %87, %88 : vector<16x128xf32>
    %c0_38 = arith.constant 0 : index
    %c0_39 = arith.constant 0 : index
    %90 = vector.load %arg12[%c0_38, %c0_39] : memref<16x128xf32, #tpu.memory_space<vmem>>, vector<16x128xf32>
    tpu.vector_store %arg12[%c0_38, %c0_39], %89 {strides = array<i32>} : memref<16x128xf32, #tpu.memory_space<vmem>>, vector<16x128xf32>,
    return
  }
  func.func @transform_0(%arg0: i32) -> (i32, i32) {
    %c0_i32 = arith.constant 0 : i32
    %c0_i32_0 = arith.constant 0 : i32
    %c0_i32_1 = arith.constant 0 : i32
    return %c0_i32, %c0_i32_0 : i32, i32
  }
  func.func @transform_1(%arg0: i32) -> (i32, i32) {
    %c0_i32 = arith.constant 0 : i32
    %c0_i32_0 = arith.constant 0 : i32
    %c0_i32_1 = arith.constant 0 : i32
    return %c0_i32, %c0_i32_0 : i32, i32
  }
  func.func @transform_2(%arg0: i32) -> (i32, i32) {
    %c0_i32 = arith.constant 0 : i32
    %c0_i32_0 = arith.constant 0 : i32
    %c0_i32_1 = arith.constant 0 : i32
    return %c0_i32, %c0_i32_0 : i32, i32
  }
  func.func @transform_3(%arg0: i32) -> (i32, i32) {
    %c0_i32 = arith.constant 0 : i32
    %c0_i32_0 = arith.constant 0 : i32
    %c0_i32_1 = arith.constant 0 : i32
    return %c0_i32, %c0_i32_0 : i32, i32
  }
  func.func @transform_4(%arg0: i32) -> (i32, i32) {
    %c0_i32 = arith.constant 0 : i32
    %c0_i32_0 = arith.constant 0 : i32
    %c0_i32_1 = arith.constant 0 : i32
    return %c0_i32, %c0_i32_0 : i32, i32
  }
  func.func @transform_5(%arg0: i32) -> (i32, i32) {
    %c0_i32 = arith.constant 0 : i32
    %c0_i32_0 = arith.constant 0 : i32
    %c0_i32_1 = arith.constant 0 : i32
    return %c0_i32, %c0_i32_0 : i32, i32
  }
  func.func @transform_6(%arg0: i32) -> (i32, i32) {
    %c0_i32 = arith.constant 0 : i32
    %c0_i32_0 = arith.constant 0 : i32
    %c0_i32_1 = arith.constant 0 : i32
    return %c0_i32, %c0_i32_0 : i32, i32
  }
  func.func @transform_7(%arg0: i32) -> (i32, i32) {
    %c0_i32 = arith.constant 0 : i32
    %c0_i32_0 = arith.constant 0 : i32
    %c0_i32_1 = arith.constant 0 : i32
    return %c0_i32, %c0_i32_0 : i32, i32
  }
  func.func @transform_8(%arg0: i32) -> (i32, i32) {
    %c0_i32 = arith.constant 0 : i32
    %c0_i32_0 = arith.constant 0 : i32
    %c0_i32_1 = arith.constant 0 : i32
    return %c0_i32, %c0_i32_0 : i32, i32
  }
  func.func @transform_9(%arg0: i32) -> (i32, i32) {
    %c0_i32 = arith.constant 0 : i32
    %c0_i32_0 = arith.constant 0 : i32
    %c0_i32_1 = arith.constant 0 : i32
    return %c0_i32, %c0_i32_0 : i32, i32
  }
  func.func @transform_10(%arg0: i32) -> (i32, i32) {
    %c0_i32 = arith.constant 0 : i32
    %c0_i32_0 = arith.constant 0 : i32
    %c0_i32_1 = arith.constant 0 : i32
    return %c0_i32, %c0_i32_0 : i32, i32
  }
  func.func @transform_11(%arg0: i32) -> (i32, i32) {
    %c0_i32 = arith.constant 0 : i32
    %c0_i32_0 = arith.constant 0 : i32
    %c0_i32_1 = arith.constant 0 : i32
    return %c0_i32, %c0_i32_0 : i32, i32
  }
}

</mosaic_0001>

<llo_original>
// kernel: tpu_custom_call.1
$region0: #{tpu_custom_call.1}
  #allocation0 [shape = 'u32[]', space=smem, size = 0x4, offset = 0x4, fixed_abs, tag = 'smem constant byte address 0x4 - core index']
  #allocation1 [shape = 'u32[72,128]{1,0:T(1,128)}', space=vmem, size = 0x9000, scoped, tag = 'internal scratch']
  %s0 = inlined_call_operand.vmem [shape: f32[16,128], index: 0, kind: input, shape index: {}]
  %s1 = inlined_call_operand.vmem [shape: bf16[128,128], index: 1, kind: input, shape index: {}]
  %s2 = inlined_call_operand.vmem [shape: f32[128,3], index: 2, kind: input, shape index: {}]
  %s3 = inlined_call_operand.vmem [shape: s32[1,128], index: 3, kind: input, shape index: {}]
  %s4 = inlined_call_operand.vmem [shape: f32[3,128], index: 4, kind: input, shape index: {}]
  %s5 = inlined_call_operand.vmem [shape: f32[1,128], index: 5, kind: input, shape index: {}]
  %s6 = inlined_call_operand.vmem [shape: f32[1,128], index: 6, kind: input, shape index: {}]
  %s7 = inlined_call_operand.vmem [shape: bf16[128,32], index: 7, kind: input, shape index: {}]
  %s8 = inlined_call_operand.vmem [shape: bf16[128,64], index: 8, kind: input, shape index: {}]
  %s9 = inlined_call_operand.vmem [shape: f32[1,32], index: 9, kind: input, shape index: {}]
  %s10 = inlined_call_operand.vmem [shape: f32[1,32], index: 10, kind: input, shape index: {}]
  %s11 = inlined_call_operand.hbm [shape: f32[16,128], index: 11, kind: output, shape index: {}]
  %s12 = sld [smem:[#allocation0]]
  $region54: #{tpu_custom_call.1} parent=0
    _
  %s14 = ssub.s32 1, %s12
  %s15 = scalar_select 0, %s14, %s12
  $region1: #{tpu_custom_call.1} parent=0
    #allocation2 [shape = 'u8[8192]{0}', space=vmem, size = 0x2000, scoped, tag = 'output window, operand 0, single buffered']
    #allocation3 [shape = 's32[1]{0}', space=sflag, size = 0x4, scoped, tag = 'scoped memory for tpu_custom_call.1']
    %16 = vsyncpa [#allocation3], 0
    // Predicated region
    $region2: #{tpu_custom_call.1} parent=1 // pred_check
      _
    $region3: #{tpu_custom_call.1} parent=1 // pred_check_branch
      %18 = sbr.rel (0) target = $region5
    $region4: #{tpu_custom_call.1} parent=1 // pred_region
      _
    $region5: #{tpu_custom_call.1} parent=1 // pred_fallthru
      _
    // Predicated region
    $region6: #{tpu_custom_call.1} parent=1 // pred_check
      _
    $region7: #{tpu_custom_call.1} parent=1 // pred_check_branch
      %20 = sbr.rel (0) target = $region9
    $region8: #{tpu_custom_call.1} parent=1 // pred_region
      _
    $region9: #{tpu_custom_call.1} parent=1 // pred_fallthru
      _
    // Predicated region
    $region10: #{tpu_custom_call.1} parent=1 // pred_check
      _
    $region11: #{tpu_custom_call.1} parent=1 // pred_check_branch
      %22 = sbr.rel (0) target = $region13
    $region12: #{tpu_custom_call.1} parent=1 // pred_region
      _
    $region13: #{tpu_custom_call.1} parent=1 // pred_fallthru
      _
    // Predicated region
    $region14: #{tpu_custom_call.1} parent=1 // pred_check
      _
    $region15: #{tpu_custom_call.1} parent=1 // pred_check_branch
      %24 = sbr.rel (0) target = $region17
    $region16: #{tpu_custom_call.1} parent=1 // pred_region
      _
    $region17: #{tpu_custom_call.1} parent=1 // pred_fallthru
      _
    // Predicated region
    $region18: #{tpu_custom_call.1} parent=1 // pred_check
      _
    $region19: #{tpu_custom_call.1} parent=1 // pred_check_branch
      %26 = sbr.rel (0) target = $region21
    $region20: #{tpu_custom_call.1} parent=1 // pred_region
      _
    $region21: #{tpu_custom_call.1} parent=1 // pred_fallthru
      _
    // Predicated region
    $region22: #{tpu_custom_call.1} parent=1 // pred_check
      _
    $region23: #{tpu_custom_call.1} parent=1 // pred_check_branch
      %28 = sbr.rel (0) target = $region25
    $region24: #{tpu_custom_call.1} parent=1 // pred_region
      _
    $region25: #{tpu_custom_call.1} parent=1 // pred_fallthru
      _
    // Predicated region
    $region26: #{tpu_custom_call.1} parent=1 // pred_check
      _
    $region27: #{tpu_custom_call.1} parent=1 // pred_check_branch
      %30 = sbr.rel (0) target = $region29
    $region28: #{tpu_custom_call.1} parent=1 // pred_region
      _
    $region29: #{tpu_custom_call.1} parent=1 // pred_fallthru
      _
    // Predicated region
    $region30: #{tpu_custom_call.1} parent=1 // pred_check
      _
    $region31: #{tpu_custom_call.1} parent=1 // pred_check_branch
      %32 = sbr.rel (0) target = $region33
    $region32: #{tpu_custom_call.1} parent=1 // pred_region
      _
    $region33: #{tpu_custom_call.1} parent=1 // pred_fallthru
      _
    // Predicated region
    $region34: #{tpu_custom_call.1} parent=1 // pred_check
      _
    $region35: #{tpu_custom_call.1} parent=1 // pred_check_branch
      %34 = sbr.rel (0) target = $region37
    $region36: #{tpu_custom_call.1} parent=1 // pred_region
      _
    $region37: #{tpu_custom_call.1} parent=1 // pred_fallthru
      _
    // Predicated region
    $region38: #{tpu_custom_call.1} parent=1 // pred_check
      _
    $region39: #{tpu_custom_call.1} parent=1 // pred_check_branch
      %36 = sbr.rel (0) target = $region41
    $region40: #{tpu_custom_call.1} parent=1 // pred_region
      _
    $region41: #{tpu_custom_call.1} parent=1 // pred_fallthru
      _
    // Predicated region
    $region42: #{tpu_custom_call.1} parent=1 // pred_check
      _
    $region43: #{tpu_custom_call.1} parent=1 // pred_check_branch
      %38 = sbr.rel (0) target = $region45
    $region44: #{tpu_custom_call.1} parent=1 // pred_region
      _
    $region45: #{tpu_custom_call.1} parent=1 // pred_fallthru
      _
    %v39 = vld [vmem:[%s2] sm:$0xff]
    %v40 = vld [vmem:[%s2 + $0x8] sm:$0xff]
    %v41 = vld [vmem:[%s2 + $0x10] sm:$0xff]
    %v42 = vld [vmem:[%s2 + $0x18] sm:$0xff]
    %v43 = vld [vmem:[%s2 + $0x20] sm:$0xff]
    %v44 = vld [vmem:[%s2 + $0x28] sm:$0xff]
    %v45 = vld [vmem:[%s2 + $0x30] sm:$0xff]
    %v46 = vld [vmem:[%s2 + $0x38] sm:$0xff]
    %v47 = vld [vmem:[%s2 + $0x40] sm:$0xff]
    %v48 = vld [vmem:[%s2 + $0x48] sm:$0xff]
    %v49 = vld [vmem:[%s2 + $0x50] sm:$0xff]
    %v50 = vld [vmem:[%s2 + $0x58] sm:$0xff]
    %v51 = vld [vmem:[%s2 + $0x60] sm:$0xff]
    %v52 = vld [vmem:[%s2 + $0x68] sm:$0xff]
    %v53 = vld [vmem:[%s2 + $0x70] sm:$0xff]
    %v54 = vld [vmem:[%s2 + $0x78] sm:$0xff]
    %v55 = vld [vmem:[%s4] sm:$0x1]
    %57 = vset.pattern.permute.xlu0 0
    %58 = vperm.xlu0 %57, %v39
    %v59 = vpop.permute.xlu0 %58
    %62 = vset.pattern.permute.xlu0 0
    %63 = vperm.xlu0 %62, %v40
    %v64 = vpop.permute.xlu0 %63
    %67 = vset.pattern.permute.xlu0 0
    %68 = vperm.xlu0 %67, %v41
    %v69 = vpop.permute.xlu0 %68
    %72 = vset.pattern.permute.xlu0 0
    %73 = vperm.xlu0 %72, %v42
    %v74 = vpop.permute.xlu0 %73
    %77 = vset.pattern.permute.xlu0 0
    %78 = vperm.xlu0 %77, %v43
    %v79 = vpop.permute.xlu0 %78
    %82 = vset.pattern.permute.xlu0 0
    %83 = vperm.xlu0 %82, %v44
    %v84 = vpop.permute.xlu0 %83
    %87 = vset.pattern.permute.xlu0 0
    %88 = vperm.xlu0 %87, %v45
    %v89 = vpop.permute.xlu0 %88
    %92 = vset.pattern.permute.xlu0 0
    %93 = vperm.xlu0 %92, %v46
    %v94 = vpop.permute.xlu0 %93
    %97 = vset.pattern.permute.xlu0 0
    %98 = vperm.xlu0 %97, %v47
    %v99 = vpop.permute.xlu0 %98
    %102 = vset.pattern.permute.xlu0 0
    %103 = vperm.xlu0 %102, %v48
    %v104 = vpop.permute.xlu0 %103
    %107 = vset.pattern.permute.xlu0 0
    %108 = vperm.xlu0 %107, %v49
    %v109 = vpop.permute.xlu0 %108
    %112 = vset.pattern.permute.xlu0 0
    %113 = vperm.xlu0 %112, %v50
    %v114 = vpop.permute.xlu0 %113
    %117 = vset.pattern.permute.xlu0 0
    %118 = vperm.xlu0 %117, %v51
    %v119 = vpop.permute.xlu0 %118
    %122 = vset.pattern.permute.xlu0 0
    %123 = vperm.xlu0 %122, %v52
    %v124 = vpop.permute.xlu0 %123
    %127 = vset.pattern.permute.xlu0 0
    %128 = vperm.xlu0 %127, %v53
    %v129 = vpop.permute.xlu0 %128
    %132 = vset.pattern.permute.xlu0 0
    %133 = vperm.xlu0 %132, %v54
    %v134 = vpop.permute.xlu0 %133
    %v136 = vperm.slane %v55, 0
    %v137 = vmul.f32 %v59, %v136
    %v138 = vmul.f32 %v64, %v136
    %v139 = vmul.f32 %v69, %v136
    %v140 = vmul.f32 %v74, %v136
    %v141 = vmul.f32 %v79, %v136
    %v142 = vmul.f32 %v84, %v136
    %v143 = vmul.f32 %v89, %v136
    %v144 = vmul.f32 %v94, %v136
    %v145 = vmul.f32 %v99, %v136
    %v146 = vmul.f32 %v104, %v136
    %v147 = vmul.f32 %v109, %v136
    %v148 = vmul.f32 %v114, %v136
    %v149 = vmul.f32 %v119, %v136
    %v150 = vmul.f32 %v124, %v136
    %v151 = vmul.f32 %v129, %v136
    %v152 = vmul.f32 %v134, %v136
    %v153 = vld [vmem:[%s4 + $0x1] sm:$0x1]
    %154 = vset.pattern.permute.xlu0 1
    %155 = vperm.xlu0 %154, %v39
    %v156 = vpop.permute.xlu0 %155
    %158 = vset.pattern.permute.xlu0 1
    %159 = vperm.xlu0 %158, %v40
    %v160 = vpop.permute.xlu0 %159
    %162 = vset.pattern.permute.xlu0 1
    %163 = vperm.xlu0 %162, %v41
    %v164 = vpop.permute.xlu0 %163
    %166 = vset.pattern.permute.xlu0 1
    %167 = vperm.xlu0 %166, %v42
    %v168 = vpop.permute.xlu0 %167
    %170 = vset.pattern.permute.xlu0 1
    %171 = vperm.xlu0 %170, %v43
    %v172 = vpop.permute.xlu0 %171
    %174 = vset.pattern.permute.xlu0 1
    %175 = vperm.xlu0 %174, %v44
    %v176 = vpop.permute.xlu0 %175
    %178 = vset.pattern.permute.xlu0 1
    %179 = vperm.xlu0 %178, %v45
    %v180 = vpop.permute.xlu0 %179
    %182 = vset.pattern.permute.xlu0 1
    %183 = vperm.xlu0 %182, %v46
    %v184 = vpop.permute.xlu0 %183
    %186 = vset.pattern.permute.xlu0 1
    %187 = vperm.xlu0 %186, %v47
    %v188 = vpop.permute.xlu0 %187
    %190 = vset.pattern.permute.xlu0 1
    %191 = vperm.xlu0 %190, %v48
    %v192 = vpop.permute.xlu0 %191
    %194 = vset.pattern.permute.xlu0 1
    %195 = vperm.xlu0 %194, %v49
    %v196 = vpop.permute.xlu0 %195
    %198 = vset.pattern.permute.xlu0 1
    %199 = vperm.xlu0 %198, %v50
    %v200 = vpop.permute.xlu0 %199
    %202 = vset.pattern.permute.xlu0 1
    %203 = vperm.xlu0 %202, %v51
    %v204 = vpop.permute.xlu0 %203
    %206 = vset.pattern.permute.xlu0 1
    %207 = vperm.xlu0 %206, %v52
    %v208 = vpop.permute.xlu0 %207
    %210 = vset.pattern.permute.xlu0 1
    %211 = vperm.xlu0 %210, %v53
    %v212 = vpop.permute.xlu0 %211
    %214 = vset.pattern.permute.xlu0 1
    %215 = vperm.xlu0 %214, %v54
    %v216 = vpop.permute.xlu0 %215
    %v218 = vperm.slane %v153, 0
    %v219 = vmul.f32 %v156, %v218
    %v220 = vmul.f32 %v160, %v218
    %v221 = vmul.f32 %v164, %v218
    %v222 = vmul.f32 %v168, %v218
    %v223 = vmul.f32 %v172, %v218
    %v224 = vmul.f32 %v176, %v218
    %v225 = vmul.f32 %v180, %v218
    %v226 = vmul.f32 %v184, %v218
    %v227 = vmul.f32 %v188, %v218
    %v228 = vmul.f32 %v192, %v218
    %v229 = vmul.f32 %v196, %v218
    %v230 = vmul.f32 %v200, %v218
    %v231 = vmul.f32 %v204, %v218
    %v232 = vmul.f32 %v208, %v218
    %v233 = vmul.f32 %v212, %v218
    %v234 = vmul.f32 %v216, %v218
    %v235 = vadd.f32 %v137, %v219
    %v236 = vadd.f32 %v138, %v220
    %v237 = vadd.f32 %v139, %v221
    %v238 = vadd.f32 %v140, %v222
    %v239 = vadd.f32 %v141, %v223
    %v240 = vadd.f32 %v142, %v224
    %v241 = vadd.f32 %v143, %v225
    %v242 = vadd.f32 %v144, %v226
    %v243 = vadd.f32 %v145, %v227
    %v244 = vadd.f32 %v146, %v228
    %v245 = vadd.f32 %v147, %v229
    %v246 = vadd.f32 %v148, %v230
    %v247 = vadd.f32 %v149, %v231
    %v248 = vadd.f32 %v150, %v232
    %v249 = vadd.f32 %v151, %v233
    %v250 = vadd.f32 %v152, %v234
    %v251 = vld [vmem:[%s4 + $0x2] sm:$0x1]
    %252 = vset.pattern.permute.xlu0 2
    %253 = vperm.xlu0 %252, %v39
    %v254 = vpop.permute.xlu0 %253
    %256 = vset.pattern.permute.xlu0 2
    %257 = vperm.xlu0 %256, %v40
    %v258 = vpop.permute.xlu0 %257
    %260 = vset.pattern.permute.xlu0 2
    %261 = vperm.xlu0 %260, %v41
    %v262 = vpop.permute.xlu0 %261
    %264 = vset.pattern.permute.xlu0 2
    %265 = vperm.xlu0 %264, %v42
    %v266 = vpop.permute.xlu0 %265
    %268 = vset.pattern.permute.xlu0 2
    %269 = vperm.xlu0 %268, %v43
    %v270 = vpop.permute.xlu0 %269
    %272 = vset.pattern.permute.xlu0 2
    %273 = vperm.xlu0 %272, %v44
    %v274 = vpop.permute.xlu0 %273
    %276 = vset.pattern.permute.xlu0 2
    %277 = vperm.xlu0 %276, %v45
    %v278 = vpop.permute.xlu0 %277
    %280 = vset.pattern.permute.xlu0 2
    %281 = vperm.xlu0 %280, %v46
    %v282 = vpop.permute.xlu0 %281
    %284 = vset.pattern.permute.xlu0 2
    %285 = vperm.xlu0 %284, %v47
    %v286 = vpop.permute.xlu0 %285
    %288 = vset.pattern.permute.xlu0 2
    %289 = vperm.xlu0 %288, %v48
    %v290 = vpop.permute.xlu0 %289
    %292 = vset.pattern.permute.xlu0 2
    %293 = vperm.xlu0 %292, %v49
    %v294 = vpop.permute.xlu0 %293
    %296 = vset.pattern.permute.xlu0 2
    %297 = vperm.xlu0 %296, %v50
    %v298 = vpop.permute.xlu0 %297
    %300 = vset.pattern.permute.xlu0 2
    %301 = vperm.xlu0 %300, %v51
    %v302 = vpop.permute.xlu0 %301
    %304 = vset.pattern.permute.xlu0 2
    %305 = vperm.xlu0 %304, %v52
    %v306 = vpop.permute.xlu0 %305
    %308 = vset.pattern.permute.xlu0 2
    %309 = vperm.xlu0 %308, %v53
    %v310 = vpop.permute.xlu0 %309
    %312 = vset.pattern.permute.xlu0 2
    %313 = vperm.xlu0 %312, %v54
    %v314 = vpop.permute.xlu0 %313
    %v316 = vperm.slane %v251, 0
    %v317 = vmul.f32 %v254, %v316
    %v318 = vmul.f32 %v258, %v316
    %v319 = vmul.f32 %v262, %v316
    %v320 = vmul.f32 %v266, %v316
    %v321 = vmul.f32 %v270, %v316
    %v322 = vmul.f32 %v274, %v316
    %v323 = vmul.f32 %v278, %v316
    %v324 = vmul.f32 %v282, %v316
    %v325 = vmul.f32 %v286, %v316
    %v326 = vmul.f32 %v290, %v316
    %v327 = vmul.f32 %v294, %v316
    %v328 = vmul.f32 %v298, %v316
    %v329 = vmul.f32 %v302, %v316
    %v330 = vmul.f32 %v306, %v316
    %v331 = vmul.f32 %v310, %v316
    %v332 = vmul.f32 %v314, %v316
    %v333 = vadd.f32 %v235, %v317
    %v334 = vadd.f32 %v236, %v318
    %v335 = vadd.f32 %v237, %v319
    %v336 = vadd.f32 %v238, %v320
    %v337 = vadd.f32 %v239, %v321
    %v338 = vadd.f32 %v240, %v322
    %v339 = vadd.f32 %v241, %v323
    %v340 = vadd.f32 %v242, %v324
    %v341 = vadd.f32 %v243, %v325
    %v342 = vadd.f32 %v244, %v326
    %v343 = vadd.f32 %v245, %v327
    %v344 = vadd.f32 %v246, %v328
    %v345 = vadd.f32 %v247, %v329
    %v346 = vadd.f32 %v248, %v330
    %v347 = vadd.f32 %v249, %v331
    %v348 = vadd.f32 %v250, %v332
    %v349 = vadd.f32 %v333, %v334
    %v350 = vadd.f32 %v349, %v335
    %v351 = vadd.f32 %v350, %v336
    %v352 = vadd.f32 %v351, %v337
    %v353 = vadd.f32 %v352, %v338
    %v354 = vadd.f32 %v353, %v339
    %v355 = vadd.f32 %v354, %v340
    %v356 = vadd.f32 %v355, %v341
    %v357 = vadd.f32 %v356, %v342
    %v358 = vadd.f32 %v357, %v343
    %v359 = vadd.f32 %v358, %v344
    %v360 = vadd.f32 %v359, %v345
    %v361 = vadd.f32 %v360, %v346
    %v362 = vadd.f32 %v361, %v347
    %v363 = vadd.f32 %v362, %v348
    %v364 = vrot.slane %v363, 4
    %v365 = vadd.f32 %v363, %v364
    %v366 = vrot.slane %v365, 2
    %v367 = vadd.f32 %v365, %v366
    %v368 = vrot.slane %v367, 1
    %v369 = vadd.f32 %v367, %v368
    %v370 = vrcp.pop 128.0
    %v371 = vmul.f32 128.0, %v370
    %v372 = vsub.f32 1.0, %v371
    %v373 = vmul.f32 %v370, %v372
    %v374 = vadd.f32 %v370, %v373
    %vm375 = vweird.f32 %v370
    %v376 = vsel %vm375, %v370, %v374
    %v377 = vmul.f32 %v369, %v376
    %v378 = vsub.f32 %v333, %v377
    %v379 = vsub.f32 %v334, %v377
    %v380 = vsub.f32 %v335, %v377
    %v381 = vsub.f32 %v336, %v377
    %v382 = vsub.f32 %v337, %v377
    %v383 = vsub.f32 %v338, %v377
    %v384 = vsub.f32 %v339, %v377
    %v385 = vsub.f32 %v340, %v377
    %v386 = vsub.f32 %v341, %v377
    %v387 = vsub.f32 %v342, %v377
    %v388 = vsub.f32 %v343, %v377
    %v389 = vsub.f32 %v344, %v377
    %v390 = vsub.f32 %v345, %v377
    %v391 = vsub.f32 %v346, %v377
    %v392 = vsub.f32 %v347, %v377
    %v393 = vsub.f32 %v348, %v377
    %v394 = vmul.f32 %v378, %v378
    %v395 = vmul.f32 %v379, %v379
    %v396 = vmul.f32 %v380, %v380
    %v397 = vmul.f32 %v381, %v381
    %v398 = vmul.f32 %v382, %v382
    %v399 = vmul.f32 %v383, %v383
    %v400 = vmul.f32 %v384, %v384
    %v401 = vmul.f32 %v385, %v385
    %v402 = vmul.f32 %v386, %v386
    %v403 = vmul.f32 %v387, %v387
    %v404 = vmul.f32 %v388, %v388
    %v405 = vmul.f32 %v389, %v389
    %v406 = vmul.f32 %v390, %v390
    %v407 = vmul.f32 %v391, %v391
    %v408 = vmul.f32 %v392, %v392
    %v409 = vmul.f32 %v393, %v393
    %v410 = vadd.f32 %v394, %v395
    %v411 = vadd.f32 %v410, %v396
    %v412 = vadd.f32 %v411, %v397
    %v413 = vadd.f32 %v412, %v398
    %v414 = vadd.f32 %v413, %v399
    %v415 = vadd.f32 %v414, %v400
    %v416 = vadd.f32 %v415, %v401
    %v417 = vadd.f32 %v416, %v402
    %v418 = vadd.f32 %v417, %v403
    %v419 = vadd.f32 %v418, %v404
    %v420 = vadd.f32 %v419, %v405
    %v421 = vadd.f32 %v420, %v406
    %v422 = vadd.f32 %v421, %v407
    %v423 = vadd.f32 %v422, %v408
    %v424 = vadd.f32 %v423, %v409
    %v425 = vrot.slane %v424, 4
    %v426 = vadd.f32 %v424, %v425
    %v427 = vrot.slane %v426, 2
    %v428 = vadd.f32 %v426, %v427
    %v429 = vrot.slane %v428, 1
    %v430 = vadd.f32 %v428, %v429
    %v431 = vmul.f32 %v430, %v376
    %v432 = vld [vmem:[%s5] sm:$0x1]
    %v433 = vadd.f32 %v431, 1e-05
    %v434 = vrsqrt.pop %v433
    %v435 = vmul.f32 %v434, %v433
    %v436 = vmul.f32 %v435, %v434
    %v437 = vmul.f32 0.5, %v436
    %v438 = vsub.f32 1.5, %v437
    %v439 = vmul.f32 %v434, %v438
    %vm440 = vweird.f32 %v433
    %vm441 = vweird.f32 %v434
    %vm442 = vmor %vm440, %vm441
    %v443 = vsel %vm442, %v434, %v439
    %v444 = vmul.f32 %v432, %v443
    %v445 = vld [vmem:[%s6] sm:$0x1]
    %v446 = vmul.f32 %v377, %v444
    %v447 = vsub.f32 %v445, %v446
    %v449 = vperm.slane %v444, 0
    %v451 = vmul.f32 %v333, %v449
    %v452 = vmul.f32 %v334, %v449
    %v453 = vmul.f32 %v335, %v449
    %v454 = vmul.f32 %v336, %v449
    %v455 = vmul.f32 %v337, %v449
    %v456 = vmul.f32 %v338, %v449
    %v457 = vmul.f32 %v339, %v449
    %v458 = vmul.f32 %v340, %v449
    %v459 = vmul.f32 %v341, %v449
    %v460 = vmul.f32 %v342, %v449
    %v461 = vmul.f32 %v343, %v449
    %v462 = vmul.f32 %v344, %v449
    %v463 = vmul.f32 %v345, %v449
    %v464 = vmul.f32 %v346, %v449
    %v465 = vmul.f32 %v347, %v449
    %v466 = vmul.f32 %v348, %v449
    %v468 = vperm.slane %v447, 0
    %v470 = vadd.f32 %v451, %v468
    %v471 = vadd.f32 %v452, %v468
    %v472 = vadd.f32 %v453, %v468
    %v473 = vadd.f32 %v454, %v468
    %v474 = vadd.f32 %v455, %v468
    %v475 = vadd.f32 %v456, %v468
    %v476 = vadd.f32 %v457, %v468
    %v477 = vadd.f32 %v458, %v468
    %v478 = vadd.f32 %v459, %v468
    %v479 = vadd.f32 %v460, %v468
    %v480 = vadd.f32 %v461, %v468
    %v481 = vadd.f32 %v462, %v468
    %v482 = vadd.f32 %v463, %v468
    %v483 = vadd.f32 %v464, %v468
    %v484 = vadd.f32 %v465, %v468
    %v485 = vadd.f32 %v466, %v468
    %v486 = vmax.f32 %v470, 0.0
    %v487 = vmax.f32 %v471, 0.0
    %v488 = vmax.f32 %v472, 0.0
    %v489 = vmax.f32 %v473, 0.0
    %v490 = vmax.f32 %v474, 0.0
    %v491 = vmax.f32 %v475, 0.0
    %v492 = vmax.f32 %v476, 0.0
    %v493 = vmax.f32 %v477, 0.0
    %v494 = vmax.f32 %v478, 0.0
    %v495 = vmax.f32 %v479, 0.0
    %v496 = vmax.f32 %v480, 0.0
    %v497 = vmax.f32 %v481, 0.0
    %v498 = vmax.f32 %v482, 0.0
    %v499 = vmax.f32 %v483, 0.0
    %v500 = vmax.f32 %v484, 0.0
    %v501 = vmax.f32 %v485, 0.0
    %v502 = vld [vmem:[%s1] sm:$0xf]
    %v503 = vld [vmem:[%s1 + $0x4] sm:$0xf]
    %v504 = vld [vmem:[%s1 + $0x8] sm:$0xf]
    %v505 = vld [vmem:[%s1 + $0xc] sm:$0xf]
    %v506 = vld [vmem:[%s1 + $0x10] sm:$0xf]
    %v507 = vld [vmem:[%s1 + $0x14] sm:$0xf]
    %v508 = vld [vmem:[%s1 + $0x18] sm:$0xf]
    %v509 = vld [vmem:[%s1 + $0x1c] sm:$0xf]
    %v510 = vld [vmem:[%s1 + $0x20] sm:$0xf]
    %v511 = vld [vmem:[%s1 + $0x24] sm:$0xf]
    %v512 = vld [vmem:[%s1 + $0x28] sm:$0xf]
    %v513 = vld [vmem:[%s1 + $0x2c] sm:$0xf]
    %v514 = vld [vmem:[%s1 + $0x30] sm:$0xf]
    %v515 = vld [vmem:[%s1 + $0x34] sm:$0xf]
    %v516 = vld [vmem:[%s1 + $0x38] sm:$0xf]
    %v517 = vld [vmem:[%s1 + $0x3c] sm:$0xf]
    %v518 = vld [vmem:[%s8] sm:$0xf]
    %v519 = vld [vmem:[%s8 + $0x4] sm:$0xf]
    %v520 = vld [vmem:[%s8 + $0x8] sm:$0xf]
    %v521 = vld [vmem:[%s8 + $0xc] sm:$0xf]
    %v522 = vld [vmem:[%s8 + $0x10] sm:$0xf]
    %v523 = vld [vmem:[%s8 + $0x14] sm:$0xf]
    %v524 = vld [vmem:[%s8 + $0x18] sm:$0xf]
    %v525 = vld [vmem:[%s8 + $0x1c] sm:$0xf]
    %v526 = vld [vmem:[%s8 + $0x20] sm:$0xf]
    %v527 = vld [vmem:[%s8 + $0x24] sm:$0xf]
    %v528 = vld [vmem:[%s8 + $0x28] sm:$0xf]
    %v529 = vld [vmem:[%s8 + $0x2c] sm:$0xf]
    %v530 = vld [vmem:[%s8 + $0x30] sm:$0xf]
    %v531 = vld [vmem:[%s8 + $0x34] sm:$0xf]
    %v532 = vld [vmem:[%s8 + $0x38] sm:$0xf]
    %v533 = vld [vmem:[%s8 + $0x3c] sm:$0xf]
    %v550 = vunpack.c.l.b16 %v502
    %v551 = vunpack.c.l.b16 %v503
    %v552 = vunpack.c.l.b16 %v504
    %v553 = vunpack.c.l.b16 %v505
    %v554 = vunpack.c.l.b16 %v506
    %v555 = vunpack.c.l.b16 %v507
    %v556 = vunpack.c.l.b16 %v508
    %v557 = vunpack.c.l.b16 %v509
    %v558 = vunpack.c.l.b16 %v510
    %v559 = vunpack.c.l.b16 %v511
    %v560 = vunpack.c.l.b16 %v512
    %v561 = vunpack.c.l.b16 %v513
    %v562 = vunpack.c.l.b16 %v514
    %v563 = vunpack.c.l.b16 %v515
    %v564 = vunpack.c.l.b16 %v516
    %v565 = vunpack.c.l.b16 %v517
    %v566 = vpack.c.b16 %v551, %v550
    %v567 = vpack.c.b16 %v553, %v552
    %v568 = vpack.c.b16 %v555, %v554
    %v569 = vpack.c.b16 %v557, %v556
    %v570 = vpack.c.b16 %v559, %v558
    %v571 = vpack.c.b16 %v561, %v560
    %v572 = vpack.c.b16 %v563, %v562
    %v573 = vpack.c.b16 %v565, %v564
    %v598 = vunpack.c.l.b16 %v518
    %v599 = vunpack.c.l.b16 %v519
    %v600 = vunpack.c.l.b16 %v520
    %v601 = vunpack.c.l.b16 %v521
    %v602 = vunpack.c.l.b16 %v522
    %v603 = vunpack.c.l.b16 %v523
    %v604 = vunpack.c.l.b16 %v524
    %v605 = vunpack.c.l.b16 %v525
    %v606 = vunpack.c.l.b16 %v526
    %v607 = vunpack.c.l.b16 %v527
    %v608 = vunpack.c.l.b16 %v528
    %v609 = vunpack.c.l.b16 %v529
    %v610 = vunpack.c.l.b16 %v530
    %v611 = vunpack.c.l.b16 %v531
    %v612 = vunpack.c.l.b16 %v532
    %v613 = vunpack.c.l.b16 %v533
    %v614 = vpack.c.b16 %v599, %v598
    %v615 = vpack.c.b16 %v601, %v600
    %v616 = vpack.c.b16 %v603, %v602
    %v617 = vpack.c.b16 %v605, %v604
    %v618 = vpack.c.b16 %v607, %v606
    %v619 = vpack.c.b16 %v609, %v608
    %v620 = vpack.c.b16 %v611, %v610
    %v621 = vpack.c.b16 %v613, %v612
    %630 = vmatpush.bf16.msra.mxu0 %v621
    %631 = vmatpush.bf16.msra.mxu0 %v620
    %632 = vmatpush.bf16.msra.mxu0 %v619
    %633 = vmatpush.bf16.msra.mxu0 %v618
    %634 = vmatpush.bf16.msra.mxu0 %v617
    %635 = vmatpush.bf16.msra.mxu0 %v616
    %636 = vmatpush.bf16.msra.mxu0 %v615
    %637 = vmatpush.bf16.msra.mxu0 %v614
    %638 = vmatmul.bf16.gmra.mxu0 %v566
    %v639 = vpop.f32.mrf.mxu0
    %v640 = vadd.f32 0.0, %v639
    %v641 = vpop.f32.mrf.mxu0
    %v642 = vadd.f32 0.0, %v641
    %643 = vmatmul.bf16.gmra.mxu0 %v567
    %v644 = vpop.f32.mrf.mxu0
    %v645 = vadd.f32 0.0, %v644
    %v646 = vpop.f32.mrf.mxu0
    %v647 = vadd.f32 0.0, %v646
    %648 = vmatmul.bf16.gmra.mxu0 %v568
    %v649 = vpop.f32.mrf.mxu0
    %v650 = vadd.f32 0.0, %v649
    %v651 = vpop.f32.mrf.mxu0
    %v652 = vadd.f32 0.0, %v651
    %653 = vmatmul.bf16.gmra.mxu0 %v569
    %v654 = vpop.f32.mrf.mxu0
    %v655 = vadd.f32 0.0, %v654
    %v656 = vpop.f32.mrf.mxu0
    %v657 = vadd.f32 0.0, %v656
    %658 = vmatmul.bf16.gmra.mxu0 %v570
    %v659 = vpop.f32.mrf.mxu0
    %v660 = vadd.f32 0.0, %v659
    %v661 = vpop.f32.mrf.mxu0
    %v662 = vadd.f32 0.0, %v661
    %663 = vmatmul.bf16.gmra.mxu0 %v571
    %v664 = vpop.f32.mrf.mxu0
    %v665 = vadd.f32 0.0, %v664
    %v666 = vpop.f32.mrf.mxu0
    %v667 = vadd.f32 0.0, %v666
    %668 = vmatmul.bf16.gmra.mxu0 %v572
    %v669 = vpop.f32.mrf.mxu0
    %v670 = vadd.f32 0.0, %v669
    %v671 = vpop.f32.mrf.mxu0
    %v672 = vadd.f32 0.0, %v671
    %673 = vmatmul.bf16.gmra.mxu0 %v573
    %v674 = vpop.f32.mrf.mxu0
    %v675 = vadd.f32 0.0, %v674
    %v676 = vpop.f32.mrf.mxu0
    %v677 = vadd.f32 0.0, %v676
    %678 = vdwg.mxu0
    %v679 = vpack.c.bf16 %v487, %v486
    %v680 = vpack.c.bf16 %v489, %v488
    %v681 = vpack.c.bf16 %v491, %v490
    %v682 = vpack.c.bf16 %v493, %v492
    %v683 = vpack.c.bf16 %v495, %v494
    %v684 = vpack.c.bf16 %v497, %v496
    %v685 = vpack.c.bf16 %v499, %v498
    %v686 = vpack.c.bf16 %v501, %v500
    %v687 = vld [vmem:[%s7] sm:$0xf]
    %v688 = vld [vmem:[%s7 + $0x4] sm:$0xf]
    %v689 = vld [vmem:[%s7 + $0x8] sm:$0xf]
    %v690 = vld [vmem:[%s7 + $0xc] sm:$0xf]
    %v691 = vld [vmem:[%s7 + $0x10] sm:$0xf]
    %v692 = vld [vmem:[%s7 + $0x14] sm:$0xf]
    %v693 = vld [vmem:[%s7 + $0x18] sm:$0xf]
    %v694 = vld [vmem:[%s7 + $0x1c] sm:$0xf]
    %v695 = vld [vmem:[%s7 + $0x20] sm:$0xf]
    %v696 = vld [vmem:[%s7 + $0x24] sm:$0xf]
    %v697 = vld [vmem:[%s7 + $0x28] sm:$0xf]
    %v698 = vld [vmem:[%s7 + $0x2c] sm:$0xf]
    %v699 = vld [vmem:[%s7 + $0x30] sm:$0xf]
    %v700 = vld [vmem:[%s7 + $0x34] sm:$0xf]
    %v701 = vld [vmem:[%s7 + $0x38] sm:$0xf]
    %v702 = vld [vmem:[%s7 + $0x3c] sm:$0xf]
    %v719 = vunpack.c.l.b16 %v687
    %v720 = vunpack.c.l.b16 %v688
    %v721 = vunpack.c.l.b16 %v689
    %v722 = vunpack.c.l.b16 %v690
    %v723 = vunpack.c.l.b16 %v691
    %v724 = vunpack.c.l.b16 %v692
    %v725 = vunpack.c.l.b16 %v693
    %v726 = vunpack.c.l.b16 %v694
    %v727 = vunpack.c.l.b16 %v695
    %v728 = vunpack.c.l.b16 %v696
    %v729 = vunpack.c.l.b16 %v697
    %v730 = vunpack.c.l.b16 %v698
    %v731 = vunpack.c.l.b16 %v699
    %v732 = vunpack.c.l.b16 %v700
    %v733 = vunpack.c.l.b16 %v701
    %v734 = vunpack.c.l.b16 %v702
    %v735 = vpack.c.b16 %v720, %v719
    %v736 = vpack.c.b16 %v722, %v721
    %v737 = vpack.c.b16 %v724, %v723
    %v738 = vpack.c.b16 %v726, %v725
    %v739 = vpack.c.b16 %v728, %v727
    %v740 = vpack.c.b16 %v730, %v729
    %v741 = vpack.c.b16 %v732, %v731
    %v742 = vpack.c.b16 %v734, %v733
    %751 = vmatpush.bf16.msra.mxu0 %v742
    %752 = vmatpush.bf16.msra.mxu0 %v741
    %753 = vmatpush.bf16.msra.mxu0 %v740
    %754 = vmatpush.bf16.msra.mxu0 %v739
    %755 = vmatpush.bf16.msra.mxu0 %v738
    %756 = vmatpush.bf16.msra.mxu0 %v737
    %757 = vmatpush.bf16.msra.mxu0 %v736
    %758 = vmatpush.bf16.msra.mxu0 %v735
    %759 = vmatmul.bf16.gmra.mxu0 %v679
    %v760 = vpop.f32.mrf.mxu0
    %v761 = vadd.f32 %v640, %v760
    %v762 = vpop.f32.mrf.mxu0
    %v763 = vadd.f32 %v642, %v762
    %764 = vmatmul.bf16.gmra.mxu0 %v680
    %v765 = vpop.f32.mrf.mxu0
    %v766 = vadd.f32 %v645, %v765
    %v767 = vpop.f32.mrf.mxu0
    %v768 = vadd.f32 %v647, %v767
    %769 = vmatmul.bf16.gmra.mxu0 %v681
    %v770 = vpop.f32.mrf.mxu0
    %v771 = vadd.f32 %v650, %v770
    %v772 = vpop.f32.mrf.mxu0
    %v773 = vadd.f32 %v652, %v772
    %774 = vmatmul.bf16.gmra.mxu0 %v682
    %v775 = vpop.f32.mrf.mxu0
    %v776 = vadd.f32 %v655, %v775
    %v777 = vpop.f32.mrf.mxu0
    %v778 = vadd.f32 %v657, %v777
    %779 = vmatmul.bf16.gmra.mxu0 %v683
    %v780 = vpop.f32.mrf.mxu0
    %v781 = vadd.f32 %v660, %v780
    %v782 = vpop.f32.mrf.mxu0
    %v783 = vadd.f32 %v662, %v782
    %784 = vmatmul.bf16.gmra.mxu0 %v684
    %v785 = vpop.f32.mrf.mxu0
    %v786 = vadd.f32 %v665, %v785
    %v787 = vpop.f32.mrf.mxu0
    %v788 = vadd.f32 %v667, %v787
    %789 = vmatmul.bf16.gmra.mxu0 %v685
    %v790 = vpop.f32.mrf.mxu0
    %v791 = vadd.f32 %v670, %v790
    %v792 = vpop.f32.mrf.mxu0
    %v793 = vadd.f32 %v672, %v792
    %794 = vmatmul.bf16.gmra.mxu0 %v686
    %v795 = vpop.f32.mrf.mxu0
    %v796 = vadd.f32 %v675, %v795
    %v797 = vpop.f32.mrf.mxu0
    %v798 = vadd.f32 %v677, %v797
    %799 = vdwg.mxu0
    %v800 = vld [vmem:[%s9] sm:$0x1]
    %v802 = vperm.slane %v800, 0
    %v804 = vadd.f32 %v761, %v802
    %v805 = vadd.f32 %v763, %v802
    %v806 = vadd.f32 %v766, %v802
    %v807 = vadd.f32 %v768, %v802
    %v808 = vadd.f32 %v771, %v802
    %v809 = vadd.f32 %v773, %v802
    %v810 = vadd.f32 %v776, %v802
    %v811 = vadd.f32 %v778, %v802
    %v812 = vadd.f32 %v781, %v802
    %v813 = vadd.f32 %v783, %v802
    %v814 = vadd.f32 %v786, %v802
    %v815 = vadd.f32 %v788, %v802
    %v816 = vadd.f32 %v791, %v802
    %v817 = vadd.f32 %v793, %v802
    %v818 = vadd.f32 %v796, %v802
    %v819 = vadd.f32 %v798, %v802
    %v820 = vmax.f32 %v804, 0.0
    %v821 = vmax.f32 %v805, 0.0
    %v822 = vmax.f32 %v806, 0.0
    %v823 = vmax.f32 %v807, 0.0
    %v824 = vmax.f32 %v808, 0.0
    %v825 = vmax.f32 %v809, 0.0
    %v826 = vmax.f32 %v810, 0.0
    %v827 = vmax.f32 %v811, 0.0
    %v828 = vmax.f32 %v812, 0.0
    %v829 = vmax.f32 %v813, 0.0
    %v830 = vmax.f32 %v814, 0.0
    %v831 = vmax.f32 %v815, 0.0
    %v832 = vmax.f32 %v816, 0.0
    %v833 = vmax.f32 %v817, 0.0
    %v834 = vmax.f32 %v818, 0.0
    %v835 = vmax.f32 %v819, 0.0
    %v836 = vld [vmem:[%s10] sm:$0x1]
    %v838 = vperm.slane %v836, 0
    %839 = vrot.lane.b32.xlu0 %v838, 32
    %v840 = vpop.permute.xlu0 %839
    %v842 = vadd.f32 %v640, %v840
    %v843 = vadd.f32 %v642, %v840
    %v844 = vadd.f32 %v645, %v840
    %v845 = vadd.f32 %v647, %v840
    %v846 = vadd.f32 %v650, %v840
    %v847 = vadd.f32 %v652, %v840
    %v848 = vadd.f32 %v655, %v840
    %v849 = vadd.f32 %v657, %v840
    %v850 = vadd.f32 %v660, %v840
    %v851 = vadd.f32 %v662, %v840
    %v852 = vadd.f32 %v665, %v840
    %v853 = vadd.f32 %v667, %v840
    %v854 = vadd.f32 %v670, %v840
    %v855 = vadd.f32 %v672, %v840
    %v856 = vadd.f32 %v675, %v840
    %v857 = vadd.f32 %v677, %v840
    %v858 = vmax.f32 %v842, 0.0
    %v859 = vmax.f32 %v843, 0.0
    %v860 = vmax.f32 %v844, 0.0
    %v861 = vmax.f32 %v845, 0.0
    %v862 = vmax.f32 %v846, 0.0
    %v863 = vmax.f32 %v847, 0.0
    %v864 = vmax.f32 %v848, 0.0
    %v865 = vmax.f32 %v849, 0.0
    %v866 = vmax.f32 %v850, 0.0
    %v867 = vmax.f32 %v851, 0.0
    %v868 = vmax.f32 %v852, 0.0
    %v869 = vmax.f32 %v853, 0.0
    %v870 = vmax.f32 %v854, 0.0
    %v871 = vmax.f32 %v855, 0.0
    %v872 = vmax.f32 %v856, 0.0
    %v873 = vmax.f32 %v857, 0.0
    %vm874 = vcmask 261120
    %v875 = vsel %vm874, %v820, -inf
    %v876 = vsel %vm874, %v821, -inf
    %v877 = vsel %vm874, %v822, -inf
    %v878 = vsel %vm874, %v823, -inf
    %v879 = vsel %vm874, %v824, -inf
    %v880 = vmax.f32 %v875, %v879
    %v881 = vsel %vm874, %v825, -inf
    %v882 = vmax.f32 %v876, %v881
    %v883 = vsel %vm874, %v826, -inf
    %v884 = vmax.f32 %v877, %v883
    %v885 = vsel %vm874, %v827, -inf
    %v886 = vmax.f32 %v878, %v885
    %v887 = vsel %vm874, %v828, -inf
    %v888 = vmax.f32 %v880, %v887
    %v889 = vsel %vm874, %v829, -inf
    %v890 = vmax.f32 %v882, %v889
    %v891 = vsel %vm874, %v830, -inf
    %v892 = vmax.f32 %v884, %v891
    %v893 = vsel %vm874, %v831, -inf
    %v894 = vmax.f32 %v886, %v893
    %v895 = vsel %vm874, %v832, -inf
    %v896 = vmax.f32 %v888, %v895
    %v897 = vsel %vm874, %v833, -inf
    %v898 = vmax.f32 %v890, %v897
    %v899 = vsel %vm874, %v834, -inf
    %v900 = vmax.f32 %v892, %v899
    %v901 = vsel %vm874, %v835, -inf
    %v902 = vmax.f32 %v894, %v901
    %v903 = vmax.f32 %v896, %v898
    %v904 = vmax.f32 %v900, %v902
    %v905 = vmax.f32 %v903, %v904
    %v906 = vrot.slane %v905, 4
    %v907 = vmax.f32 %v905, %v906
    %v908 = vrot.slane %v907, 2
    %v909 = vmax.f32 %v907, %v908
    %v910 = vrot.slane %v909, 1
    %v911 = vmax.f32 %v909, %v910
    %v912 = vsub.f32 %v820, %v911
    %v913 = vsub.f32 %v821, %v911
    %v914 = vsub.f32 %v822, %v911
    %v915 = vsub.f32 %v823, %v911
    %v916 = vsub.f32 %v824, %v911
    %v917 = vsub.f32 %v825, %v911
    %v918 = vsub.f32 %v826, %v911
    %v919 = vsub.f32 %v827, %v911
    %v920 = vsub.f32 %v828, %v911
    %v921 = vsub.f32 %v829, %v911
    %v922 = vsub.f32 %v830, %v911
    %v923 = vsub.f32 %v831, %v911
    %v924 = vsub.f32 %v832, %v911
    %v925 = vsub.f32 %v833, %v911
    %v926 = vsub.f32 %v834, %v911
    %v927 = vsub.f32 %v835, %v911
    %v928 = vmul.f32 %v912, 1.442695
    %v929 = vpow.pop %v928
    %v930 = vmul.f32 %v913, 1.442695
    %v931 = vpow.pop %v930
    %v932 = vmul.f32 %v914, 1.442695
    %v933 = vpow.pop %v932
    %v934 = vmul.f32 %v915, 1.442695
    %v935 = vpow.pop %v934
    %v936 = vmul.f32 %v916, 1.442695
    %v937 = vpow.pop %v936
    %v938 = vmul.f32 %v917, 1.442695
    %v939 = vpow.pop %v938
    %v940 = vmul.f32 %v918, 1.442695
    %v941 = vpow.pop %v940
    %v942 = vmul.f32 %v919, 1.442695
    %v943 = vpow.pop %v942
    %v944 = vmul.f32 %v920, 1.442695
    %v945 = vpow.pop %v944
    %v946 = vmul.f32 %v921, 1.442695
    %v947 = vpow.pop %v946
    %v948 = vmul.f32 %v922, 1.442695
    %v949 = vpow.pop %v948
    %v950 = vmul.f32 %v923, 1.442695
    %v951 = vpow.pop %v950
    %v952 = vmul.f32 %v924, 1.442695
    %v953 = vpow.pop %v952
    %v954 = vmul.f32 %v925, 1.442695
    %v955 = vpow.pop %v954
    %v956 = vmul.f32 %v926, 1.442695
    %v957 = vpow.pop %v956
    %v958 = vmul.f32 %v927, 1.442695
    %v959 = vpow.pop %v958
    %v960 = vlaneseq
    %v961 = vshrl.u32 %v960, 7
    %v962 = vadd.s32 %v961, 8
    %v963 = vld [vmem:[%s3] sm:$0x1]
    %v964 = vperm.slane %v963, 0
    %vm965 = vcmp.eq.s32.totalorder %v961, %v964
    %vm966 = vcmp.eq.s32.totalorder %v962, %v964
    %v967 = vsel %vm965, 1.0, 0.0
    %v968 = vsel %vm966, 1.0, 0.0
    %v969 = vpack.c.bf16 %v968, %v967
    %986 = vrot.lane.b32.xlu0 %v929, 32
    %v987 = vpop.permute.xlu0 %986
    %988 = vrot.lane.b32.xlu0 %v931, 32
    %v989 = vpop.permute.xlu0 %988
    %990 = vrot.lane.b32.xlu0 %v933, 32
    %v991 = vpop.permute.xlu0 %990
    %992 = vrot.lane.b32.xlu0 %v935, 32
    %v993 = vpop.permute.xlu0 %992
    %994 = vrot.lane.b32.xlu0 %v937, 32
    %v995 = vpop.permute.xlu0 %994
    %996 = vrot.lane.b32.xlu0 %v939, 32
    %v997 = vpop.permute.xlu0 %996
    %998 = vrot.lane.b32.xlu0 %v941, 32
    %v999 = vpop.permute.xlu0 %998
    %1000 = vrot.lane.b32.xlu0 %v943, 32
    %v1001 = vpop.permute.xlu0 %1000
    %1002 = vrot.lane.b32.xlu0 %v945, 32
    %v1003 = vpop.permute.xlu0 %1002
    %1004 = vrot.lane.b32.xlu0 %v947, 32
    %v1005 = vpop.permute.xlu0 %1004
    %1006 = vrot.lane.b32.xlu0 %v949, 32
    %v1007 = vpop.permute.xlu0 %1006
    %1008 = vrot.lane.b32.xlu0 %v951, 32
    %v1009 = vpop.permute.xlu0 %1008
    %1010 = vrot.lane.b32.xlu0 %v953, 32
    %v1011 = vpop.permute.xlu0 %1010
    %1012 = vrot.lane.b32.xlu0 %v955, 32
    %v1013 = vpop.permute.xlu0 %1012
    %1014 = vrot.lane.b32.xlu0 %v957, 32
    %v1015 = vpop.permute.xlu0 %1014
    %1016 = vrot.lane.b32.xlu0 %v959, 32
    %v1017 = vpop.permute.xlu0 %1016
    %v1034 = vmul.f32 %v858, %v987
    %v1035 = vmul.f32 %v859, %v989
    %v1036 = vmul.f32 %v860, %v991
    %v1037 = vmul.f32 %v861, %v993
    %v1038 = vmul.f32 %v862, %v995
    %v1039 = vmul.f32 %v863, %v997
    %v1040 = vmul.f32 %v864, %v999
    %v1041 = vmul.f32 %v865, %v1001
    %v1042 = vmul.f32 %v866, %v1003
    %v1043 = vmul.f32 %v867, %v1005
    %v1044 = vmul.f32 %v868, %v1007
    %v1045 = vmul.f32 %v869, %v1009
    %v1046 = vmul.f32 %v870, %v1011
    %v1047 = vmul.f32 %v871, %v1013
    %v1048 = vmul.f32 %v872, %v1015
    %v1049 = vmul.f32 %v873, %v1017
    %v1050 = vsel %vm874, %v929, %v1034
    %v1051 = vsel %vm874, %v931, %v1035
    %v1052 = vsel %vm874, %v933, %v1036
    %v1053 = vsel %vm874, %v935, %v1037
    %v1054 = vsel %vm874, %v937, %v1038
    %v1055 = vsel %vm874, %v939, %v1039
    %v1056 = vsel %vm874, %v941, %v1040
    %v1057 = vsel %vm874, %v943, %v1041
    %v1058 = vsel %vm874, %v945, %v1042
    %v1059 = vsel %vm874, %v947, %v1043
    %v1060 = vsel %vm874, %v949, %v1044
    %v1061 = vsel %vm874, %v951, %v1045
    %v1062 = vsel %vm874, %v953, %v1046
    %v1063 = vsel %vm874, %v955, %v1047
    %v1064 = vsel %vm874, %v957, %v1048
    %v1065 = vsel %vm874, %v959, %v1049
    %v1066 = vpack.c.bf16 %v1051, %v1050
    %v1067 = vpack.c.bf16 %v1053, %v1052
    %v1068 = vpack.c.bf16 %v1055, %v1054
    %v1069 = vpack.c.bf16 %v1057, %v1056
    %v1070 = vpack.c.bf16 %v1059, %v1058
    %v1071 = vpack.c.bf16 %v1061, %v1060
    %v1072 = vpack.c.bf16 %v1063, %v1062
    %v1073 = vpack.c.bf16 %v1065, %v1064
    %1074 = vmatpush.bf16.msra.mxu0 %v1073
    %1075 = vmatpush.bf16.msra.mxu0 %v1072
    %1076 = vmatpush.bf16.msra.mxu0 %v1071
    %1077 = vmatpush.bf16.msra.mxu0 %v1070
    %1078 = vmatpush.bf16.msra.mxu0 %v1069
    %1079 = vmatpush.bf16.msra.mxu0 %v1068
    %1080 = vmatpush.bf16.msra.mxu0 %v1067
    %1081 = vmatpush.bf16.msra.mxu0 %v1066
    %1082 = vmatmul.bf16.gmra.mxu0 %v969
    %v1083 = vpop.f32.mrf.mxu0
    %v1084 = vadd.f32 0.0, %v1083
    %v1085 = vpop.f32.mrf.mxu0
    %v1086 = vadd.f32 0.0, %v1085
    %1087 = vdwg.mxu0
    %vm1088 = vcmp.gt.f32.partialorder %v1084, 0.0
    %vm1089 = vcmp.gt.f32.partialorder %v1086, 0.0
    %v1090 = vrcp.pop %v1084
    %v1091 = vrcp.pop %v1086
    %v1092 = vsel %vm1088, %v1090, 0.0
    %v1093 = vsel %vm1089, %v1091, 0.0
    %1096 = vrot.lane.b32.xlu0 %v1092, 32
    %v1097 = vpop.permute.xlu0 %1096
    %1098 = vrot.lane.b32.xlu0 %v1093, 32
    %v1099 = vpop.permute.xlu0 %1098
    %v1102 = vmul.f32 %v1084, %v1097
    %v1103 = vmul.f32 %v1086, %v1099
    %v1104 = vld [vmem:[%s0] sm:$0xff]
    %v1105 = vld [vmem:[%s0 + $0x8] sm:$0xff]
    %1108 = vrot.lane.b32.xlu0 %v1102, 96
    %v1109 = vpop.permute.xlu0 %1108
    %1110 = vrot.lane.b32.xlu0 %v1103, 96
    %v1111 = vpop.permute.xlu0 %1110
    %1114 = vrot.lane.b32.xlu0 %v1102, 32
    %v1115 = vpop.permute.xlu0 %1114
    %1116 = vrot.lane.b32.xlu0 %v1103, 32
    %v1117 = vpop.permute.xlu0 %1116
    %1120 = vrot.lane.b32.xlu0 %v1102, 64
    %v1121 = vpop.permute.xlu0 %1120
    %1122 = vrot.lane.b32.xlu0 %v1103, 64
    %v1123 = vpop.permute.xlu0 %1122
    %v1126 = vsel %vm874, %v1109, %v1102
    %v1127 = vsel %vm874, %v1111, %v1103
    %vm1128 = vcmask 523264
    %v1129 = vsel %vm1128, %v1126, %v1115
    %v1130 = vsel %vm1128, %v1127, %v1117
    %vm1131 = vcmask 785408
    %v1132 = vsel %vm1131, %v1129, %v1121
    %v1133 = vsel %vm1131, %v1130, %v1123
    %v1134 = vadd.f32 %v1104, %v1132
    %v1135 = vadd.f32 %v1105, %v1133
    %1136 = vst [vmem:[#allocation2] sm:$0xff] %v1134
    %1137 = vst [vmem:[#allocation2 + $0x8] sm:$0xff] %v1135
    // Predicated region
    $region46: #{tpu_custom_call.1} parent=1 // pred_check
      _
    $region47: #{tpu_custom_call.1} parent=1 // pred_check_branch
      %1139 = sbr.rel (0) target = $region49
    $region48: #{tpu_custom_call.1} parent=1 // pred_region
      %1141 = vsyncadd [#allocation3], 0
      %s1142 = sshll.u32 [#allocation2], 4
      %s1143 = int_to_ptr.vmem [resolvable:$true] %s1142
      %s1144 = sshll.u32 %s11, 4
      %s1145 = int_to_ptr.hbm [resolvable:$true] %s1144
      %1150 = dma.vmem_to_hbm [thread:$0]  %s1143, 256, %s1145, [#allocation3], 128, 128, 8
    $region49: #{tpu_custom_call.1} parent=1 // pred_fallthru
      _
    // Predicated region
    $region50: #{tpu_custom_call.1} parent=1 // pred_check
      _
    $region51: #{tpu_custom_call.1} parent=1 // pred_check_branch
      %1152 = sbr.rel (0) target = $region53
    $region52: #{tpu_custom_call.1} parent=1 // pred_region
      %1154 = dma.done [#allocation3], 256
    $region53: #{tpu_custom_call.1} parent=1 // pred_fallthru
      _
    %1155 = vsyncpa [#allocation3], 1

</llo_original>
